<compile_context>
chip_gen: v7x
topology: tpu7x:2x2x1
jax: 0.10.0
libtpu: 0.0.40
codegen_flags: <defaults>
</compile_context>

<pallas_src>
from itertools import combinations

import jax
import jax.numpy as jnp
from jax.experimental import pallas as pl
from jax.experimental.pallas import tpu as pltpu


def _rna_norm_sum_kernel(x_ref, seg_ref, out_ref, acc_ref):
    """Accumulates per-chunk sums of per-row L2 norms for one row-split."""
    i = pl.program_id(1)                        # inner (reduction) axis

    @pl.when(i == 0)
    def _init():
        acc_ref[...] = jnp.zeros_like(acc_ref)

    x = x_ref[...].astype(jnp.float32)          # (row_tile, d_total)
    sq = x * x                                  # one VPU pass
    # Segmented per-chunk sum over the feature axis on the MXU:
    # seg is a resident block-diagonal 0/1 matrix of shape (d_total, c_pad).
    chunk_sq = jnp.dot(sq, seg_ref[...],
                       preferred_element_type=jnp.float32,
                       precision=jax.lax.Precision.HIGHEST)   # (row_tile, c_pad)
    norms = jnp.sqrt(chunk_sq)                  # per-row, per-chunk L2 norm
    # Vectorized accumulate: fold sublane groups into an (8, c_pad) accumulator
    # (pure VPU adds; no per-step cross-lane / scalar reductions).
    rt, cp = norms.shape
    acc_ref[...] += jnp.sum(norms.reshape(rt // 8, 8, cp), axis=0)

    @pl.when(i == pl.num_programs(1) - 1)
    def _flush():
        out_ref[...] = acc_ref[...]


def rna_loss(output, input_dim, *,
             vmem_budget_bytes=16 * 1024 * 1024,   # budget for double-buffered input tile
             max_row_tile=2048,
             num_row_splits=2):
    """Pallas implementation of RNALoss.forward(output)."""
    d_total = output.shape[-1]
    assert d_total % input_dim == 0, "last dim must be a multiple of input_dim"
    num_chunks = d_total // input_dim
    c_pad = ((num_chunks + 127) // 128) * 128   # lane-pad the chunk axis
    num_row_splits = max(1, int(num_row_splits))

    x2d = output.reshape(-1, d_total)
    rows = x2d.shape[0]
    itemsize = jnp.dtype(x2d.dtype).itemsize

    # Row tile: largest 8-aligned tile whose double-buffered input fits the
    # VMEM budget (v7x-safe), capped, and no larger than one split's work.
    tile_cap = max(8, vmem_budget_bytes // (2 * d_total * max(itemsize, 4)))
    row_tile = max(8, (min(max_row_tile, tile_cap) // 8) * 8)
    per_split = -(-rows // num_row_splits)                     # ceil
    row_tile = min(row_tile, max(8, ((per_split + 7) // 8) * 8))
    n_inner = max(1, -(-per_split // row_tile))                # blocks per split
    padded_rows = num_row_splits * n_inner * row_tile

    if padded_rows != rows:
        # Zero rows have zero norm -> contribute 0 to every per-chunk sum.
        x2d = jnp.pad(x2d, ((0, padded_rows - rows), (0, 0)))

    # Block-diagonal 0/1 segment-sum matrix: feature j belongs to chunk j // input_dim.
    feat_chunk = jnp.arange(d_total, dtype=jnp.int32) // input_dim
    seg = (feat_chunk[:, None] == jnp.arange(c_pad, dtype=jnp.int32)[None, :]
           ).astype(jnp.float32)

    grid = (num_row_splits, n_inner)
    partial = pl.pallas_call(
        _rna_norm_sum_kernel,
        out_shape=jax.ShapeDtypeStruct((num_row_splits * 8, c_pad), jnp.float32),
        grid_spec=pltpu.PrefetchScalarGridSpec(
            num_scalar_prefetch=0,
            grid=grid,
            in_specs=[
                pl.BlockSpec((row_tile, d_total),
                             lambda c, i: (c * n_inner + i, 0)),
                pl.BlockSpec((d_total, c_pad), lambda c, i: (0, 0)),  # resident mask
            ],
            out_specs=pl.BlockSpec((8, c_pad), lambda c, i: (c, 0)),
            scratch_shapes=[pltpu.VMEM((8, c_pad), jnp.float32)],
        ),
        compiler_params=pltpu.CompilerParams(
            dimension_semantics=("parallel", "arbitrary"),   # splits x row-reduction
            vmem_limit_bytes=48 * 1024 * 1024,               # safe on v5e/v6e/v7x
        ),
    )(x2d, seg)

    # Tiny epilogue in JAX: per-chunk means, then
    #   sum_{a<b} (min/max - 1)^2  ==  0.5 * sum_{a != b} (min/max - 1)^2
    norm_sums = jnp.sum(partial, axis=0)[:num_chunks]
    means = norm_sums / jnp.float32(rows)        # divide by TRUE row count
    lo = jnp.minimum(means[:, None], means[None, :])
    hi = jnp.maximum(means[:, None], means[None, :])
    hi = jnp.where(hi == 0, jnp.float32(1.0), hi)
    pair = (lo / hi - 1.0) ** 2
    off_diag = 1.0 - jnp.eye(num_chunks, dtype=pair.dtype)
    return 0.5 * jnp.sum(pair * off_diag)


def rna_loss_ref(output, input_dim):
    """Pure-JAX reference mirroring the PyTorch module."""
    d_total = output.shape[-1]
    num_chunks = d_total // input_dim
    chunks = jnp.split(output, num_chunks, axis=-1)
    mfn = [jnp.mean(jnp.sqrt(jnp.sum(c.astype(jnp.float32) ** 2, axis=-1)))
           for c in chunks]
    mfn = sorted(mfn, key=float)
    loss = jnp.float32(0.0)
    for f1, f2 in combinations(mfn, 2):
        loss = loss + (f1 / f2 - 1.0) ** 2
    return loss


if __name__ == "__main__":
    key = jax.random.PRNGKey(0)

    # Case 1: batch=2, seq=8, features = 4 chunks * input_dim 32
    input_dim = 32
    output = jax.random.normal(key, (2, 8, 128), dtype=jnp.float32)
    loss = jax.block_until_ready(rna_loss(output, input_dim))
    ref = jax.block_until_ready(rna_loss_ref(output, input_dim))
    assert jnp.allclose(loss, ref, rtol=1e-4, atol=1e-6), (loss, ref)

    # Case 2: non-8-divisible row count (exercises zero-padding path), 5 chunks.
    key2 = jax.random.PRNGKey(0)
    output2 = jax.random.normal(key2, (3, 7, 160), dtype=jnp.float32)
    loss2 = jax.block_until_ready(rna_loss(output2, input_dim))
    ref2 = jax.block_until_ready(rna_loss_ref(output2, input_dim))
    assert jnp.allclose(loss2, ref2, rtol=1e-4, atol=1e-6), (loss2, ref2)

    print("KERNEL_OK")
</pallas_src>

<mosaic_0001>
module attributes {stable_mosaic.version = 11 : i64} {
  func.func @_rna_norm_sum_kernel(%arg0: i32, %arg1: i32, %arg2: memref<8x128xf32, #tpu.memory_space<vmem>>, %arg3: memref<128x128xf32, #tpu.memory_space<vmem>>, %arg4: memref<8x128xf32, #tpu.memory_space<vmem>>, %arg5: memref<8x128xf32, #tpu.memory_space<vmem>>) attributes {dimension_semantics = [#tpu.dimension_semantics<parallel>, #tpu.dimension_semantics<arbitrary>], iteration_bounds = array<i64: 2, 1>, scalar_prefetch = 0 : i64, scratch_operands = 1 : i64, tpu.core_type = #tpu.core_type<tc>, window_params = [{transform_indices = @transform_0, window_bounds = array<i64: 8, 128>}, {pipeline_mode = #tpu.pipeline_mode<synchronous>, transform_indices = @transform_1, window_bounds = array<i64: 128, 128>}, {transform_indices = @transform_2, window_bounds = array<i64: 8, 128>}]} {
    %c0_i32 = arith.constant 0 : i32
    %0 = arith.cmpi eq, %arg1, %c0_i32 : i32
    %1 = arith.extui %0 : i1 to i32
    %c0_i32_0 = arith.constant 0 : i32
    %2 = arith.cmpi ne, %1, %c0_i32_0 : i32
    scf.if %2 {
      %cst_11 = arith.constant 0.000000e+00 : f32
      %16 = vector.broadcast %cst_11 : f32 to vector<8x128xf32>
      %c0_12 = arith.constant 0 : index
      %c0_13 = arith.constant 0 : index
      %17 = vector.load %arg5[%c0_12, %c0_13] : memref<8x128xf32, #tpu.memory_space<vmem>>, vector<8x128xf32>
      tpu.vector_store %arg5[%c0_12, %c0_13], %16 {strides = array<i32>} : memref<8x128xf32, #tpu.memory_space<vmem>>, vector<8x128xf32>,
    } else {
    }
    %c0 = arith.constant 0 : index
    %c0_1 = arith.constant 0 : index
    %3 = vector.load %arg2[%c0, %c0_1] : memref<8x128xf32, #tpu.memory_space<vmem>>, vector<8x128xf32>
    %4 = arith.mulf %3, %3 : vector<8x128xf32>
    %c0_2 = arith.constant 0 : index
    %c0_3 = arith.constant 0 : index
    %5 = vector.load %arg3[%c0_2, %c0_3] : memref<128x128xf32, #tpu.memory_space<vmem>>, vector<128x128xf32>
    %cst = arith.constant dense<0.000000e+00> : vector<8x128xf32>
    %6 = tpu.matmul %4, %5, %cst {dimension_numbers = #tpu.dot_dimension_numbers<[1], [0], [0], [1], [0, 0, 1, 1], [], []>, precision = #tpu.contract_precision<fp32>} : vector<8x128xf32>, vector<128x128xf32>, vector<8x128xf32> -> vector<8x128xf32>
    %7 = math.sqrt %6 : vector<8x128xf32>
    %c0_4 = arith.constant 0 : index
    %c0_5 = arith.constant 0 : index
    %8 = vector.load %arg5[%c0_4, %c0_5] : memref<8x128xf32, #tpu.memory_space<vmem>>, vector<8x128xf32>
    %9 = vector.shape_cast %7 : vector<8x128xf32> to vector<1x8x128xf32>
    %cst_6 = arith.constant dense<0.000000e+00> : vector<8x128xf32>
    %10 = vector.multi_reduction <add>, %9, %cst_6 [0] : vector<1x8x128xf32> to vector<8x128xf32>
    %11 = arith.addf %8, %10 : vector<8x128xf32>
    %c0_7 = arith.constant 0 : index
    %c0_8 = arith.constant 0 : index
    %12 = vector.load %arg5[%c0_7, %c0_8] : memref<8x128xf32, #tpu.memory_space<vmem>>, vector<8x128xf32>
    tpu.vector_store %arg5[%c0_7, %c0_8], %11 {strides = array<i32>} : memref<8x128xf32, #tpu.memory_space<vmem>>, vector<8x128xf32>,
    %c0_i32_9 = arith.constant 0 : i32
    %13 = arith.cmpi eq, %arg1, %c0_i32_9 : i32
    %14 = arith.extui %13 : i1 to i32
    %c0_i32_10 = arith.constant 0 : i32
    %15 = arith.cmpi ne, %14, %c0_i32_10 : i32
    scf.if %15 {
      %c0_11 = arith.constant 0 : index
      %c0_12 = arith.constant 0 : index
      %16 = vector.load %arg5[%c0_11, %c0_12] : memref<8x128xf32, #tpu.memory_space<vmem>>, vector<8x128xf32>
      %c0_13 = arith.constant 0 : index
      %c0_14 = arith.constant 0 : index
      %17 = vector.load %arg4[%c0_13, %c0_14] : memref<8x128xf32, #tpu.memory_space<vmem>>, vector<8x128xf32>
      tpu.vector_store %arg4[%c0_13, %c0_14], %16 {strides = array<i32>} : memref<8x128xf32, #tpu.memory_space<vmem>>, vector<8x128xf32>,
    } else {
    }
    return
  }
  func.func @transform_0(%arg0: i32, %arg1: i32) -> (i32, i32) {
    %c1_i32 = arith.constant 1 : i32
    %0 = arith.muli %arg0, %c1_i32 : i32
    %1 = arith.addi %0, %arg1 : i32
    %c0_i32 = arith.constant 0 : i32
    %c0_i32_0 = arith.constant 0 : i32
    return %1, %c0_i32 : i32, i32
  }
  func.func @transform_1(%arg0: i32, %arg1: i32) -> (i32, i32) {
    %c0_i32 = arith.constant 0 : i32
    %c0_i32_0 = arith.constant 0 : i32
    %c0_i32_1 = arith.constant 0 : i32
    return %c0_i32, %c0_i32_0 : i32, i32
  }
  func.func @transform_2(%arg0: i32, %arg1: i32) -> (i32, i32) {
    %c0_i32 = arith.constant 0 : i32
    %c0_i32_0 = arith.constant 0 : i32
    return %arg0, %c0_i32 : i32, i32
  }
}

</mosaic_0001>

<llo_original>
// kernel: tpu_custom_call.1
$region0: #{tpu_custom_call.1}
  #allocation0 [shape = 'u32[]', space=smem, size = 0x4, offset = 0x4, fixed_abs, tag = 'smem constant byte address 0x4 - core index']
  #allocation1 [shape = 'u32[144,128]{1,0:T(1,128)}', space=vmem, size = 0x12000, scoped, tag = 'internal scratch']
  #allocation2 [shape = 'f32[8,128]{1,0:T(8,128)}', space=vmem, size = 0x1000, scoped, tag = 'scratch operand']
  %s0 = inlined_call_operand.hbm [shape: f32[16,128], index: 0, kind: input, shape index: {}]
  %s1 = inlined_call_operand.hbm [shape: f32[128,128], index: 1, kind: input, shape index: {}]
  %s2 = inlined_call_operand.hbm [shape: f32[16,128], index: 2, kind: output, shape index: {}]
  %s3 = sld [smem:[#allocation0]]
  $region57: #{tpu_custom_call.1} parent=0
    _
  %s5 = ssub.s32 1, %s3
  %s6 = scalar_select 0, %s5, %s3
  $region1: #{tpu_custom_call.1} parent=0
    #allocation3 [shape = 'u8[8192]{0}', space=vmem, size = 0x2000, scoped, tag = 'input window, operand 0']
    #allocation4 [shape = 's32[2]{0}', space=sflag, size = 0x8, scoped, tag = 'scoped memory for tpu_custom_call.1']
    #allocation5 [shape = 's32[2]{0}', space=sflag, size = 0x8, scoped, tag = 'scoped memory for tpu_custom_call.1']
    #allocation6 [shape = 'u8[65536]{0}', space=vmem, size = 0x10000, scoped, tag = 'input window, operand 1, single buffered']
    #allocation7 [shape = 's32[1]{0}', space=sflag, size = 0x4, scoped, tag = 'scoped memory for tpu_custom_call.1']
    #allocation8 [shape = 'u8[8192]{0}', space=vmem, size = 0x2000, scoped, tag = 'output window, operand 0']
    %7 = vsyncpa [#allocation4], 0
    %s8 = scalar_lea.sflag [#allocation4], 1
    %9 = vsyncpa %s8, 0
    %10 = vsyncpa [#allocation7], 0
    %11 = vsyncpa [#allocation5], 0
    %s12 = scalar_lea.sflag [#allocation5], 1
    %13 = vsyncpa %s12, 0
    loop: start=0, step=1, limit=4
    $region2: #{tpu_custom_call.1} parent=1 // loop_pre_header
      _
    $region3: #{tpu_custom_call.1} parent=1 // loop_header
      %s15 = sphi 0, %s19
      %p16 = scmp.ge.s32.totalorder %s15, 4
      %s22 = sphi 0, %s34
      %s23 = sphi 0, %s30
      %s24 = sphi 0, %s22
      %s25 = sphi 0, %s23
      %s26 = sphi 0, %s24
      %s27 = sphi 0, %s25
      %s39 = sphi 0, %s41
      %s42 = sphi 0, %s39
      %s43 = sphi 0, %s42
      %s59 = sphi 0, %s43
      %s63 = sphi 0, %s63
      %s65 = sphi 0, %s63
      %s66 = sphi 0, %s65
      %s80 = sphi 0, %s66
      %s86 = sphi 0, %s88
      %s89 = sphi 0, %s86
      %s90 = sphi 0, %s89
      %s106 = sphi 0, %s90
    $region4: #{tpu_custom_call.1} parent=1 // loop_header_branch
      %18 = sbr.rel (%p16) target = $region8
    $region5: #{tpu_custom_call.1} parent=1 // loop_body
      %s20 = ssub.s32 %s15, 1
      %s21 = ssub.s32 %s15, 2
      %s28 = sadd.s32 1, %s23
      %p29 = scmp.ge.s32.totalorder %s28, 1
      %s30 = scalar_select %p29, 0, %s28
      %s31 = sadd.s32 1, %s22
      %s32 = scalar_select %p29, %s31, %s22
      %p33 = scmp.ge.s32.totalorder %s32, 2
      %s34 = scalar_select %p33, 0, %s32
      %s35 = sadd.s32 %s22, %s23
      %s36 = sadd.s32 %s34, %s30
      %s37 = ssub.s32 %s35, %s36
      %p38 = scmp.eq.s32.totalorder %s37, 0
      %s40 = sadd.s32 %s39, 1
      %s41 = scalar_select %p38, %s39, %s40
      %p44 = pneg %p38
      %p45 = scmp.eq.s32.totalorder %s15, 1
      %p46 = por %p44, %p45
      %p47 = scmp.ne.s32.totalorder %s39, %s42
      %p48 = scmp.eq.s32.totalorder %s15, 0
      %p49 = por %p47, %p48
      %p50 = scmp.ne.s32.totalorder %s39, %s42
      %p51 = scmp.eq.s32.totalorder %s20, 1
      %p52 = por %p50, %p51
      %p53 = scmp.ne.s32.totalorder %s42, %s43
      %p54 = scmp.eq.s32.totalorder %s20, 0
      %p55 = por %p53, %p54
      %p56 = scmp.ne.s32.totalorder %s42, %s43
      %p57 = scmp.eq.s32.totalorder %s21, 1
      %p58 = por %p56, %p57
      %p60 = scmp.ne.s32.totalorder %s43, %s59
      %p61 = scmp.eq.s32.totalorder %s21, 0
      %p62 = por %p60, %p61
      %s64 = sadd.s32 %s63, 1
      %p67 = scmp.eq.s32.totalorder %s15, 1
      %p68 = scmp.ne.s32.totalorder %s63, %s65
      %p69 = scmp.eq.s32.totalorder %s15, 0
      %p70 = por %p68, %p69
      %p71 = scmp.ne.s32.totalorder %s63, %s65
      %p72 = scmp.eq.s32.totalorder %s20, 1
      %p73 = por %p71, %p72
      %p74 = scmp.ne.s32.totalorder %s65, %s66
      %p75 = scmp.eq.s32.totalorder %s20, 0
      %p76 = por %p74, %p75
      %p77 = scmp.ne.s32.totalorder %s65, %s66
      %p78 = scmp.eq.s32.totalorder %s21, 1
      %p79 = por %p77, %p78
      %p81 = scmp.ne.s32.totalorder %s66, %s80
      %p82 = scmp.eq.s32.totalorder %s21, 0
      %p83 = por %p81, %p82
      %s84 = ssub.s32 %s22, %s34
      %p85 = scmp.eq.s32.totalorder %s84, 0
      %s87 = sadd.s32 %s86, 1
      %s88 = scalar_select %p85, %s86, %s87
      %p91 = pneg %p85
      %p92 = scmp.eq.s32.totalorder %s15, 1
      %p93 = por %p91, %p92
      %p94 = scmp.ne.s32.totalorder %s86, %s89
      %p95 = scmp.eq.s32.totalorder %s15, 0
      %p96 = por %p94, %p95
      %p97 = scmp.ne.s32.totalorder %s86, %s89
      %p98 = scmp.eq.s32.totalorder %s20, 1
      %p99 = por %p97, %p98
      %p100 = scmp.ne.s32.totalorder %s89, %s90
      %p101 = scmp.eq.s32.totalorder %s20, 0
      %p102 = por %p100, %p101
      %p103 = scmp.ne.s32.totalorder %s89, %s90
      %p104 = scmp.eq.s32.totalorder %s21, 1
      %p105 = por %p103, %p104
      %p107 = scmp.ne.s32.totalorder %s90, %s106
      %p108 = scmp.eq.s32.totalorder %s21, 0
      %p109 = por %p107, %p108
      %p110 = scmp.le.s32.totalorder 1, %s15
      %p111 = scmp.lt.s32.totalorder %s15, 3
      %p112 = pnand %p110, %p111
      %p113 = pneg %p112
      // Predicated region
      $region9: #{tpu_custom_call.1} parent=5 // pred_check
        _
      $region10: #{tpu_custom_call.1} parent=5 // pred_check_branch
        %115 = sbr.rel (%p112) target = $region12
      $region11: #{tpu_custom_call.1} parent=5 // pred_region
        %s116 = ssub.s32 %s15, 1
        // Predicated region
        $region13: #{tpu_custom_call.1} parent=11 // pred_check
          %p117 = pneg %p76
        $region14: #{tpu_custom_call.1} parent=11 // pred_check_branch
          %119 = sbr.rel (%p117) target = $region16
        $region15: #{tpu_custom_call.1} parent=11 // pred_region
          %s121 = ssub.s32 2048, 2048
          %122 = vsyncadd [#allocation7], %s121
          %s123 = sshll.u32 [#allocation6], 4
          %s124 = int_to_ptr.vmem [resolvable:$true] %s123
          %129 = dma.hbm_to_vmem [thread:$0]  %s1, 2048, %s124, [#allocation7], 128, 128, 8
        $region16: #{tpu_custom_call.1} parent=11 // pred_fallthru
          _
      $region12: #{tpu_custom_call.1} parent=5 // pred_fallthru
        _
      %p130 = scmp.lt.s32.totalorder %s15, 2
      // Predicated region
      $region17: #{tpu_custom_call.1} parent=5 // pred_check
        %p131 = pneg %p130
      $region18: #{tpu_custom_call.1} parent=5 // pred_check_branch
        %133 = sbr.rel (%p131) target = $region20
      $region19: #{tpu_custom_call.1} parent=5 // pred_region
        // Predicated region
        $region21: #{tpu_custom_call.1} parent=19 // pred_check
          %p134 = pneg %p49
        $region22: #{tpu_custom_call.1} parent=19 // pred_check_branch
          %136 = sbr.rel (%p134) target = $region24
        $region23: #{tpu_custom_call.1} parent=19 // pred_region
          %s137 = sand.u32 %s39, 1
          %s138 = scalar_lea.sflag [#allocation4], %s137
          %s139 = sand.u32 %s39, 1
          %s140 = smul.addr %s139, 8
          %s141 = scalar_lea.vmem [#allocation3], %s140
          %s142 = sadd.s32 %s22, %s23
          %s144 = ssub.s32 128, 128
          %145 = vsyncadd %s138, %s144
          %s146 = smul.addr %s142, 128
          %s147 = scalar_lea.hbm %s0, %s146
          %s149 = sshll.u32 %s141, 4
          %s150 = int_to_ptr.vmem [resolvable:$true] %s149
          %152 = dma.hbm_to_vmem [thread:$0]  %s147, 128, %s150, %s138
        $region24: #{tpu_custom_call.1} parent=19 // pred_fallthru
          _
      $region20: #{tpu_custom_call.1} parent=5 // pred_fallthru
        _
      %p153 = scmp.le.s32.totalorder 1, %s15
      %p154 = scmp.lt.s32.totalorder %s15, 3
      %p155 = pnand %p153, %p154
      %p156 = pneg %p155
      // Predicated region
      $region25: #{tpu_custom_call.1} parent=5 // pred_check
        _
      $region26: #{tpu_custom_call.1} parent=5 // pred_check_branch
        %158 = sbr.rel (%p155) target = $region28
      $region27: #{tpu_custom_call.1} parent=5 // pred_region
        %s159 = ssub.s32 %s15, 1
        %s160 = sand.u32 %s42, 1
        %s161 = scalar_lea.sflag [#allocation4], %s160
        %s162 = sand.u32 %s42, 1
        %s163 = smul.addr %s162, 8
        %s164 = scalar_lea.vmem [#allocation3], %s163
        // Predicated region
        $region29: #{tpu_custom_call.1} parent=27 // pred_check
          %p165 = pneg %p55
        $region30: #{tpu_custom_call.1} parent=27 // pred_check_branch
          %167 = sbr.rel (%p165) target = $region32
        $region31: #{tpu_custom_call.1} parent=27 // pred_region
          %168 = dma.done %s161, 128
        $region32: #{tpu_custom_call.1} parent=27 // pred_fallthru
          _
        // Predicated region
        $region33: #{tpu_custom_call.1} parent=27 // pred_check
          %p169 = pneg %p76
        $region34: #{tpu_custom_call.1} parent=27 // pred_check_branch
          %171 = sbr.rel (%p169) target = $region36
        $region35: #{tpu_custom_call.1} parent=27 // pred_region
          %172 = dma.done [#allocation7], 2048
        $region36: #{tpu_custom_call.1} parent=27 // pred_fallthru
          _
        %s173 = sand.u32 %s42, 1
        %s174 = scalar_lea.sflag [#allocation4], %s173
        %s175 = sand.u32 %s42, 1
        %s176 = smul.addr %s175, 8
        %s177 = scalar_lea.vmem [#allocation3], %s176
        %p178 = pneg %p55
        %p179 = pneg %p52
        %p180 = pneg %p76
        %p181 = pneg %p73
        %p182 = pneg %p102
        %p183 = pneg %p99
        %s184 = sand.u32 %s89, 1
        %s185 = scalar_lea.sflag [#allocation5], %s184
        %s186 = sand.u32 %s89, 1
        %s187 = smul.addr %s186, 8
        %s188 = scalar_lea.vmem [#allocation8], %s187
        %s189 = sadd.s32 %s24, %s25
        %p190 = scmp.eq.s32.totalorder %s25, 0
        // Predicated region
        $region37: #{tpu_custom_call.1} parent=27 // pred_check
          %p191 = pneg %p190
        $region38: #{tpu_custom_call.1} parent=27 // pred_check_branch
          %193 = sbr.rel (%p191) target = $region40
        $region39: #{tpu_custom_call.1} parent=27 // pred_region
          %194 = vst [vmem:[#allocation2] sm:$0xff] 0.0
        $region40: #{tpu_custom_call.1} parent=27 // pred_fallthru
          _
        %v195 = vld [vmem:[%s164] sm:$0xff]
        %v196 = vmul.f32 %v195, %v195
        %v197 = vld [vmem:[#allocation6] sm:$0xff]
        %v198 = vld [vmem:[#allocation6 + $0x8] sm:$0xff]
        %v199 = vld [vmem:[#allocation6 + $0x10] sm:$0xff]
        %v200 = vld [vmem:[#allocation6 + $0x18] sm:$0xff]
        %v201 = vld [vmem:[#allocation6 + $0x20] sm:$0xff]
        %v202 = vld [vmem:[#allocation6 + $0x28] sm:$0xff]
        %v203 = vld [vmem:[#allocation6 + $0x30] sm:$0xff]
        %v204 = vld [vmem:[#allocation6 + $0x38] sm:$0xff]
        %v205 = vld [vmem:[#allocation6 + $0x40] sm:$0xff]
        %v206 = vld [vmem:[#allocation6 + $0x48] sm:$0xff]
        %v207 = vld [vmem:[#allocation6 + $0x50] sm:$0xff]
        %v208 = vld [vmem:[#allocation6 + $0x58] sm:$0xff]
        %v209 = vld [vmem:[#allocation6 + $0x60] sm:$0xff]
        %v210 = vld [vmem:[#allocation6 + $0x68] sm:$0xff]
        %v211 = vld [vmem:[#allocation6 + $0x70] sm:$0xff]
        %v212 = vld [vmem:[#allocation6 + $0x78] sm:$0xff]
        %213 = vmatprep.subr.mxu0 0.0
        %v214 = vand.u32 %v197, 4294901760
        %215 = vmatpush1.msra.mxu0 %v214
        %216 = vmatprep.subr.mxu0 0.0
        %v217 = vand.u32 %v198, 4294901760
        %218 = vmatpush1.msra.mxu0 %v217
        %219 = vmatprep.subr.mxu0 0.0
        %v220 = vand.u32 %v199, 4294901760
        %221 = vmatpush1.msra.mxu0 %v220
        %222 = vmatprep.subr.mxu0 0.0
        %v223 = vand.u32 %v200, 4294901760
        %224 = vmatpush1.msra.mxu0 %v223
        %225 = vmatprep.subr.mxu0 0.0
        %v226 = vand.u32 %v201, 4294901760
        %227 = vmatpush1.msra.mxu0 %v226
        %228 = vmatprep.subr.mxu0 0.0
        %v229 = vand.u32 %v202, 4294901760
        %230 = vmatpush1.msra.mxu0 %v229
        %231 = vmatprep.subr.mxu0 0.0
        %v232 = vand.u32 %v203, 4294901760
        %233 = vmatpush1.msra.mxu0 %v232
        %234 = vmatprep.subr.mxu0 0.0
        %v235 = vand.u32 %v204, 4294901760
        %236 = vmatpush1.msra.mxu0 %v235
        %237 = vmatprep.subr.mxu0 0.0
        %v238 = vand.u32 %v205, 4294901760
        %239 = vmatpush1.msra.mxu0 %v238
        %240 = vmatprep.subr.mxu0 0.0
        %v241 = vand.u32 %v206, 4294901760
        %242 = vmatpush1.msra.mxu0 %v241
        %243 = vmatprep.subr.mxu0 0.0
        %v244 = vand.u32 %v207, 4294901760
        %245 = vmatpush1.msra.mxu0 %v244
        %246 = vmatprep.subr.mxu0 0.0
        %v247 = vand.u32 %v208, 4294901760
        %248 = vmatpush1.msra.mxu0 %v247
        %249 = vmatprep.subr.mxu0 0.0
        %v250 = vand.u32 %v209, 4294901760
        %251 = vmatpush1.msra.mxu0 %v250
        %252 = vmatprep.subr.mxu0 0.0
        %v253 = vand.u32 %v210, 4294901760
        %254 = vmatpush1.msra.mxu0 %v253
        %255 = vmatprep.subr.mxu0 0.0
        %v256 = vand.u32 %v211, 4294901760
        %257 = vmatpush1.msra.mxu0 %v256
        %258 = vmatprep.subr.mxu0 0.0
        %v259 = vand.u32 %v212, 4294901760
        %260 = vmatpush1.msra.mxu0 %v259
        %261 = vmatprep.subr.mxu0 0.0
        %262 = vmatpush1.msra.mxu0 0.0
        %263 = vmatprep.subr.mxu0 0.0
        %264 = vmatpush1.msra.mxu0 0.0
        %265 = vmatprep.subr.mxu0 0.0
        %266 = vmatpush1.msra.mxu0 0.0
        %267 = vmatprep.subr.mxu0 0.0
        %268 = vmatpush1.msra.mxu0 0.0
        %269 = vmatprep.subr.mxu0 0.0
        %270 = vmatpush1.msra.mxu0 0.0
        %271 = vmatprep.subr.mxu0 0.0
        %272 = vmatpush1.msra.mxu0 0.0
        %273 = vmatprep.subr.mxu0 0.0
        %274 = vmatpush1.msra.mxu0 0.0
        %275 = vmatprep.subr.mxu0 0.0
        %276 = vmatpush1.msra.mxu0 0.0
        %277 = vmatprep.subr.mxu0 0.0
        %278 = vmatpush1.msra.mxu0 0.0
        %279 = vmatprep.subr.mxu0 0.0
        %280 = vmatpush1.msra.mxu0 0.0
        %281 = vmatprep.subr.mxu0 0.0
        %282 = vmatpush1.msra.mxu0 0.0
        %283 = vmatprep.subr.mxu0 0.0
        %284 = vmatpush1.msra.mxu0 0.0
        %285 = vmatprep.subr.mxu0 0.0
        %286 = vmatpush1.msra.mxu0 0.0
        %287 = vmatprep.subr.mxu0 0.0
        %288 = vmatpush1.msra.mxu0 0.0
        %289 = vmatprep.subr.mxu0 0.0
        %290 = vmatpush1.msra.mxu0 0.0
        %291 = vmatprep.subr.mxu0 0.0
        %292 = vmatpush1.msra.mxu0 0.0
        %293 = vmatprep.mubr.f32.mxu0 0.0
        %v294 = vand.u32 %v196, 4294901760
        %v295 = vsub.f32 %v196, %v294
        %v296 = vand.u32 %v295, 4294901760
        %v297 = vsub.f32 %v295, %v296
        %v298 = vand.u32 %v297, 4294901760
        %299 = vmatmul.mubr.f32.gmra.mrb[0].mxu0 %v298
        %v300 = vpop.f32.mrb[0].mxu0
        %v301 = vadd.f32 0.0, %v300
        %v302 = vpop.f32.mrb[0].mxu0
        %303 = vdwg.mxu0
        %304 = vmatprep.subr.mxu0 0.0
        %v305 = vand.u32 %v197, 4294901760
        %v306 = vsub.f32 %v197, %v305
        %v307 = vand.u32 %v306, 4294901760
        %v308 = vsub.f32 %v306, %v307
        %v309 = vand.u32 %v308, 4294901760
        %310 = vmatpush1.msra.mxu0 %v309
        %311 = vmatprep.subr.mxu0 0.0
        %v312 = vand.u32 %v198, 4294901760
        %v313 = vsub.f32 %v198, %v312
        %v314 = vand.u32 %v313, 4294901760
        %v315 = vsub.f32 %v313, %v314
        %v316 = vand.u32 %v315, 4294901760
        %317 = vmatpush1.msra.mxu0 %v316
        %318 = vmatprep.subr.mxu0 0.0
        %v319 = vand.u32 %v199, 4294901760
        %v320 = vsub.f32 %v199, %v319
        %v321 = vand.u32 %v320, 4294901760
        %v322 = vsub.f32 %v320, %v321
        %v323 = vand.u32 %v322, 4294901760
        %324 = vmatpush1.msra.mxu0 %v323
        %325 = vmatprep.subr.mxu0 0.0
        %v326 = vand.u32 %v200, 4294901760
        %v327 = vsub.f32 %v200, %v326
        %v328 = vand.u32 %v327, 4294901760
        %v329 = vsub.f32 %v327, %v328
        %v330 = vand.u32 %v329, 4294901760
        %331 = vmatpush1.msra.mxu0 %v330
        %332 = vmatprep.subr.mxu0 0.0
        %v333 = vand.u32 %v201, 4294901760
        %v334 = vsub.f32 %v201, %v333
        %v335 = vand.u32 %v334, 4294901760
        %v336 = vsub.f32 %v334, %v335
        %v337 = vand.u32 %v336, 4294901760
        %338 = vmatpush1.msra.mxu0 %v337
        %339 = vmatprep.subr.mxu0 0.0
        %v340 = vand.u32 %v202, 4294901760
        %v341 = vsub.f32 %v202, %v340
        %v342 = vand.u32 %v341, 4294901760
        %v343 = vsub.f32 %v341, %v342
        %v344 = vand.u32 %v343, 4294901760
        %345 = vmatpush1.msra.mxu0 %v344
        %346 = vmatprep.subr.mxu0 0.0
        %v347 = vand.u32 %v203, 4294901760
        %v348 = vsub.f32 %v203, %v347
        %v349 = vand.u32 %v348, 4294901760
        %v350 = vsub.f32 %v348, %v349
        %v351 = vand.u32 %v350, 4294901760
        %352 = vmatpush1.msra.mxu0 %v351
        %353 = vmatprep.subr.mxu0 0.0
        %v354 = vand.u32 %v204, 4294901760
        %v355 = vsub.f32 %v204, %v354
        %v356 = vand.u32 %v355, 4294901760
        %v357 = vsub.f32 %v355, %v356
        %v358 = vand.u32 %v357, 4294901760
        %359 = vmatpush1.msra.mxu0 %v358
        %360 = vmatprep.subr.mxu0 0.0
        %v361 = vand.u32 %v205, 4294901760
        %v362 = vsub.f32 %v205, %v361
        %v363 = vand.u32 %v362, 4294901760
        %v364 = vsub.f32 %v362, %v363
        %v365 = vand.u32 %v364, 4294901760
        %366 = vmatpush1.msra.mxu0 %v365
        %367 = vmatprep.subr.mxu0 0.0
        %v368 = vand.u32 %v206, 4294901760
        %v369 = vsub.f32 %v206, %v368
        %v370 = vand.u32 %v369, 4294901760
        %v371 = vsub.f32 %v369, %v370
        %v372 = vand.u32 %v371, 4294901760
        %373 = vmatpush1.msra.mxu0 %v372
        %374 = vmatprep.subr.mxu0 0.0
        %v375 = vand.u32 %v207, 4294901760
        %v376 = vsub.f32 %v207, %v375
        %v377 = vand.u32 %v376, 4294901760
        %v378 = vsub.f32 %v376, %v377
        %v379 = vand.u32 %v378, 4294901760
        %380 = vmatpush1.msra.mxu0 %v379
        %381 = vmatprep.subr.mxu0 0.0
        %v382 = vand.u32 %v208, 4294901760
        %v383 = vsub.f32 %v208, %v382
        %v384 = vand.u32 %v383, 4294901760
        %v385 = vsub.f32 %v383, %v384
        %v386 = vand.u32 %v385, 4294901760
        %387 = vmatpush1.msra.mxu0 %v386
        %388 = vmatprep.subr.mxu0 0.0
        %v389 = vand.u32 %v209, 4294901760
        %v390 = vsub.f32 %v209, %v389
        %v391 = vand.u32 %v390, 4294901760
        %v392 = vsub.f32 %v390, %v391
        %v393 = vand.u32 %v392, 4294901760
        %394 = vmatpush1.msra.mxu0 %v393
        %395 = vmatprep.subr.mxu0 0.0
        %v396 = vand.u32 %v210, 4294901760
        %v397 = vsub.f32 %v210, %v396
        %v398 = vand.u32 %v397, 4294901760
        %v399 = vsub.f32 %v397, %v398
        %v400 = vand.u32 %v399, 4294901760
        %401 = vmatpush1.msra.mxu0 %v400
        %402 = vmatprep.subr.mxu0 0.0
        %v403 = vand.u32 %v211, 4294901760
        %v404 = vsub.f32 %v211, %v403
        %v405 = vand.u32 %v404, 4294901760
        %v406 = vsub.f32 %v404, %v405
        %v407 = vand.u32 %v406, 4294901760
        %408 = vmatpush1.msra.mxu0 %v407
        %409 = vmatprep.subr.mxu0 0.0
        %v410 = vand.u32 %v212, 4294901760
        %v411 = vsub.f32 %v212, %v410
        %v412 = vand.u32 %v411, 4294901760
        %v413 = vsub.f32 %v411, %v412
        %v414 = vand.u32 %v413, 4294901760
        %415 = vmatpush1.msra.mxu0 %v414
        %416 = vmatprep.subr.mxu0 0.0
        %417 = vmatpush1.msra.mxu0 0.0
        %418 = vmatprep.subr.mxu0 0.0
        %419 = vmatpush1.msra.mxu0 0.0
        %420 = vmatprep.subr.mxu0 0.0
        %421 = vmatpush1.msra.mxu0 0.0
        %422 = vmatprep.subr.mxu0 0.0
        %423 = vmatpush1.msra.mxu0 0.0
        %424 = vmatprep.subr.mxu0 0.0
        %425 = vmatpush1.msra.mxu0 0.0
        %426 = vmatprep.subr.mxu0 0.0
        %427 = vmatpush1.msra.mxu0 0.0
        %428 = vmatprep.subr.mxu0 0.0
        %429 = vmatpush1.msra.mxu0 0.0
        %430 = vmatprep.subr.mxu0 0.0
        %431 = vmatpush1.msra.mxu0 0.0
        %432 = vmatprep.subr.mxu0 0.0
        %433 = vmatpush1.msra.mxu0 0.0
        %434 = vmatprep.subr.mxu0 0.0
        %435 = vmatpush1.msra.mxu0 0.0
        %436 = vmatprep.subr.mxu0 0.0
        %437 = vmatpush1.msra.mxu0 0.0
        %438 = vmatprep.subr.mxu0 0.0
        %439 = vmatpush1.msra.mxu0 0.0
        %440 = vmatprep.subr.mxu0 0.0
        %441 = vmatpush1.msra.mxu0 0.0
        %442 = vmatprep.subr.mxu0 0.0
        %443 = vmatpush1.msra.mxu0 0.0
        %444 = vmatprep.subr.mxu0 0.0
        %445 = vmatpush1.msra.mxu0 0.0
        %446 = vmatprep.subr.mxu0 0.0
        %447 = vmatpush1.msra.mxu0 0.0
        %448 = vmatprep.mubr.f32.mxu0 0.0
        %v449 = vand.u32 %v196, 4294901760
        %450 = vmatmul.mubr.f32.gmra.mrb[0].mxu0 %v449
        %v451 = vpop.f32.mrb[0].mxu0
        %v452 = vadd.f32 %v301, %v451
        %v453 = vpop.f32.mrb[0].mxu0
        %454 = vdwg.mxu0
        %455 = vmatprep.subr.mxu0 0.0
        %v456 = vand.u32 %v197, 4294901760
        %v457 = vsub.f32 %v197, %v456
        %458 = vmatpush1.msra.mxu0 %v457
        %459 = vmatprep.subr.mxu0 0.0
        %v460 = vand.u32 %v198, 4294901760
        %v461 = vsub.f32 %v198, %v460
        %462 = vmatpush1.msra.mxu0 %v461
        %463 = vmatprep.subr.mxu0 0.0
        %v464 = vand.u32 %v199, 4294901760
        %v465 = vsub.f32 %v199, %v464
        %466 = vmatpush1.msra.mxu0 %v465
        %467 = vmatprep.subr.mxu0 0.0
        %v468 = vand.u32 %v200, 4294901760
        %v469 = vsub.f32 %v200, %v468
        %470 = vmatpush1.msra.mxu0 %v469
        %471 = vmatprep.subr.mxu0 0.0
        %v472 = vand.u32 %v201, 4294901760
        %v473 = vsub.f32 %v201, %v472
        %474 = vmatpush1.msra.mxu0 %v473
        %475 = vmatprep.subr.mxu0 0.0
        %v476 = vand.u32 %v202, 4294901760
        %v477 = vsub.f32 %v202, %v476
        %478 = vmatpush1.msra.mxu0 %v477
        %479 = vmatprep.subr.mxu0 0.0
        %v480 = vand.u32 %v203, 4294901760
        %v481 = vsub.f32 %v203, %v480
        %482 = vmatpush1.msra.mxu0 %v481
        %483 = vmatprep.subr.mxu0 0.0
        %v484 = vand.u32 %v204, 4294901760
        %v485 = vsub.f32 %v204, %v484
        %486 = vmatpush1.msra.mxu0 %v485
        %487 = vmatprep.subr.mxu0 0.0
        %v488 = vand.u32 %v205, 4294901760
        %v489 = vsub.f32 %v205, %v488
        %490 = vmatpush1.msra.mxu0 %v489
        %491 = vmatprep.subr.mxu0 0.0
        %v492 = vand.u32 %v206, 4294901760
        %v493 = vsub.f32 %v206, %v492
        %494 = vmatpush1.msra.mxu0 %v493
        %495 = vmatprep.subr.mxu0 0.0
        %v496 = vand.u32 %v207, 4294901760
        %v497 = vsub.f32 %v207, %v496
        %498 = vmatpush1.msra.mxu0 %v497
        %499 = vmatprep.subr.mxu0 0.0
        %v500 = vand.u32 %v208, 4294901760
        %v501 = vsub.f32 %v208, %v500
        %502 = vmatpush1.msra.mxu0 %v501
        %503 = vmatprep.subr.mxu0 0.0
        %v504 = vand.u32 %v209, 4294901760
        %v505 = vsub.f32 %v209, %v504
        %506 = vmatpush1.msra.mxu0 %v505
        %507 = vmatprep.subr.mxu0 0.0
        %v508 = vand.u32 %v210, 4294901760
        %v509 = vsub.f32 %v210, %v508
        %510 = vmatpush1.msra.mxu0 %v509
        %511 = vmatprep.subr.mxu0 0.0
        %v512 = vand.u32 %v211, 4294901760
        %v513 = vsub.f32 %v211, %v512
        %514 = vmatpush1.msra.mxu0 %v513
        %515 = vmatprep.subr.mxu0 0.0
        %v516 = vand.u32 %v212, 4294901760
        %v517 = vsub.f32 %v212, %v516
        %518 = vmatpush1.msra.mxu0 %v517
        %519 = vmatprep.subr.mxu0 0.0
        %520 = vmatpush1.msra.mxu0 0.0
        %521 = vmatprep.subr.mxu0 0.0
        %522 = vmatpush1.msra.mxu0 0.0
        %523 = vmatprep.subr.mxu0 0.0
        %524 = vmatpush1.msra.mxu0 0.0
        %525 = vmatprep.subr.mxu0 0.0
        %526 = vmatpush1.msra.mxu0 0.0
        %527 = vmatprep.subr.mxu0 0.0
        %528 = vmatpush1.msra.mxu0 0.0
        %529 = vmatprep.subr.mxu0 0.0
        %530 = vmatpush1.msra.mxu0 0.0
        %531 = vmatprep.subr.mxu0 0.0
        %532 = vmatpush1.msra.mxu0 0.0
        %533 = vmatprep.subr.mxu0 0.0
        %534 = vmatpush1.msra.mxu0 0.0
        %535 = vmatprep.subr.mxu0 0.0
        %536 = vmatpush1.msra.mxu0 0.0
        %537 = vmatprep.subr.mxu0 0.0
        %538 = vmatpush1.msra.mxu0 0.0
        %539 = vmatprep.subr.mxu0 0.0
        %540 = vmatpush1.msra.mxu0 0.0
        %541 = vmatprep.subr.mxu0 0.0
        %542 = vmatpush1.msra.mxu0 0.0
        %543 = vmatprep.subr.mxu0 0.0
        %544 = vmatpush1.msra.mxu0 0.0
        %545 = vmatprep.subr.mxu0 0.0
        %546 = vmatpush1.msra.mxu0 0.0
        %547 = vmatprep.subr.mxu0 0.0
        %548 = vmatpush1.msra.mxu0 0.0
        %549 = vmatprep.subr.mxu0 0.0
        %550 = vmatpush1.msra.mxu0 0.0
        %551 = vmatprep.mubr.f32.mxu0 0.0
        %v552 = vand.u32 %v196, 4294901760
        %v553 = vsub.f32 %v196, %v552
        %554 = vmatmul.mubr.f32.gmra.mrb[0].mxu0 %v553
        %v555 = vpop.f32.mrb[0].mxu0
        %v556 = vadd.f32 %v452, %v555
        %v557 = vpop.f32.mrb[0].mxu0
        %558 = vdwg.mxu0
        %559 = vmatprep.subr.mxu0 0.0
        %v560 = vand.u32 %v197, 4294901760
        %561 = vmatpush1.msra.mxu0 %v560
        %562 = vmatprep.subr.mxu0 0.0
        %v563 = vand.u32 %v198, 4294901760
        %564 = vmatpush1.msra.mxu0 %v563
        %565 = vmatprep.subr.mxu0 0.0
        %v566 = vand.u32 %v199, 4294901760
        %567 = vmatpush1.msra.mxu0 %v566
        %568 = vmatprep.subr.mxu0 0.0
        %v569 = vand.u32 %v200, 4294901760
        %570 = vmatpush1.msra.mxu0 %v569
        %571 = vmatprep.subr.mxu0 0.0
        %v572 = vand.u32 %v201, 4294901760
        %573 = vmatpush1.msra.mxu0 %v572
        %574 = vmatprep.subr.mxu0 0.0
        %v575 = vand.u32 %v202, 4294901760
        %576 = vmatpush1.msra.mxu0 %v575
        %577 = vmatprep.subr.mxu0 0.0
        %v578 = vand.u32 %v203, 4294901760
        %579 = vmatpush1.msra.mxu0 %v578
        %580 = vmatprep.subr.mxu0 0.0
        %v581 = vand.u32 %v204, 4294901760
        %582 = vmatpush1.msra.mxu0 %v581
        %583 = vmatprep.subr.mxu0 0.0
        %v584 = vand.u32 %v205, 4294901760
        %585 = vmatpush1.msra.mxu0 %v584
        %586 = vmatprep.subr.mxu0 0.0
        %v587 = vand.u32 %v206, 4294901760
        %588 = vmatpush1.msra.mxu0 %v587
        %589 = vmatprep.subr.mxu0 0.0
        %v590 = vand.u32 %v207, 4294901760
        %591 = vmatpush1.msra.mxu0 %v590
        %592 = vmatprep.subr.mxu0 0.0
        %v593 = vand.u32 %v208, 4294901760
        %594 = vmatpush1.msra.mxu0 %v593
        %595 = vmatprep.subr.mxu0 0.0
        %v596 = vand.u32 %v209, 4294901760
        %597 = vmatpush1.msra.mxu0 %v596
        %598 = vmatprep.subr.mxu0 0.0
        %v599 = vand.u32 %v210, 4294901760
        %600 = vmatpush1.msra.mxu0 %v599
        %601 = vmatprep.subr.mxu0 0.0
        %v602 = vand.u32 %v211, 4294901760
        %603 = vmatpush1.msra.mxu0 %v602
        %604 = vmatprep.subr.mxu0 0.0
        %v605 = vand.u32 %v212, 4294901760
        %606 = vmatpush1.msra.mxu0 %v605
        %607 = vmatprep.subr.mxu0 0.0
        %608 = vmatpush1.msra.mxu0 0.0
        %609 = vmatprep.subr.mxu0 0.0
        %610 = vmatpush1.msra.mxu0 0.0
        %611 = vmatprep.subr.mxu0 0.0
        %612 = vmatpush1.msra.mxu0 0.0
        %613 = vmatprep.subr.mxu0 0.0
        %614 = vmatpush1.msra.mxu0 0.0
        %615 = vmatprep.subr.mxu0 0.0
        %616 = vmatpush1.msra.mxu0 0.0
        %617 = vmatprep.subr.mxu0 0.0
        %618 = vmatpush1.msra.mxu0 0.0
        %619 = vmatprep.subr.mxu0 0.0
        %620 = vmatpush1.msra.mxu0 0.0
        %621 = vmatprep.subr.mxu0 0.0
        %622 = vmatpush1.msra.mxu0 0.0
        %623 = vmatprep.subr.mxu0 0.0
        %624 = vmatpush1.msra.mxu0 0.0
        %625 = vmatprep.subr.mxu0 0.0
        %626 = vmatpush1.msra.mxu0 0.0
        %627 = vmatprep.subr.mxu0 0.0
        %628 = vmatpush1.msra.mxu0 0.0
        %629 = vmatprep.subr.mxu0 0.0
        %630 = vmatpush1.msra.mxu0 0.0
        %631 = vmatprep.subr.mxu0 0.0
        %632 = vmatpush1.msra.mxu0 0.0
        %633 = vmatprep.subr.mxu0 0.0
        %634 = vmatpush1.msra.mxu0 0.0
        %635 = vmatprep.subr.mxu0 0.0
        %636 = vmatpush1.msra.mxu0 0.0
        %637 = vmatprep.subr.mxu0 0.0
        %638 = vmatpush1.msra.mxu0 0.0
        %639 = vmatprep.mubr.f32.mxu0 0.0
        %v640 = vand.u32 %v196, 4294901760
        %v641 = vsub.f32 %v196, %v640
        %v642 = vand.u32 %v641, 4294901760
        %643 = vmatmul.mubr.f32.gmra.mrb[0].mxu0 %v642
        %v644 = vpop.f32.mrb[0].mxu0
        %v645 = vadd.f32 %v556, %v644
        %v646 = vpop.f32.mrb[0].mxu0
        %647 = vdwg.mxu0
        %648 = vmatprep.subr.mxu0 0.0
        %v649 = vand.u32 %v197, 4294901760
        %v650 = vsub.f32 %v197, %v649
        %v651 = vand.u32 %v650, 4294901760
        %652 = vmatpush1.msra.mxu0 %v651
        %653 = vmatprep.subr.mxu0 0.0
        %v654 = vand.u32 %v198, 4294901760
        %v655 = vsub.f32 %v198, %v654
        %v656 = vand.u32 %v655, 4294901760
        %657 = vmatpush1.msra.mxu0 %v656
        %658 = vmatprep.subr.mxu0 0.0
        %v659 = vand.u32 %v199, 4294901760
        %v660 = vsub.f32 %v199, %v659
        %v661 = vand.u32 %v660, 4294901760
        %662 = vmatpush1.msra.mxu0 %v661
        %663 = vmatprep.subr.mxu0 0.0
        %v664 = vand.u32 %v200, 4294901760
        %v665 = vsub.f32 %v200, %v664
        %v666 = vand.u32 %v665, 4294901760
        %667 = vmatpush1.msra.mxu0 %v666
        %668 = vmatprep.subr.mxu0 0.0
        %v669 = vand.u32 %v201, 4294901760
        %v670 = vsub.f32 %v201, %v669
        %v671 = vand.u32 %v670, 4294901760
        %672 = vmatpush1.msra.mxu0 %v671
        %673 = vmatprep.subr.mxu0 0.0
        %v674 = vand.u32 %v202, 4294901760
        %v675 = vsub.f32 %v202, %v674
        %v676 = vand.u32 %v675, 4294901760
        %677 = vmatpush1.msra.mxu0 %v676
        %678 = vmatprep.subr.mxu0 0.0
        %v679 = vand.u32 %v203, 4294901760
        %v680 = vsub.f32 %v203, %v679
        %v681 = vand.u32 %v680, 4294901760
        %682 = vmatpush1.msra.mxu0 %v681
        %683 = vmatprep.subr.mxu0 0.0
        %v684 = vand.u32 %v204, 4294901760
        %v685 = vsub.f32 %v204, %v684
        %v686 = vand.u32 %v685, 4294901760
        %687 = vmatpush1.msra.mxu0 %v686
        %688 = vmatprep.subr.mxu0 0.0
        %v689 = vand.u32 %v205, 4294901760
        %v690 = vsub.f32 %v205, %v689
        %v691 = vand.u32 %v690, 4294901760
        %692 = vmatpush1.msra.mxu0 %v691
        %693 = vmatprep.subr.mxu0 0.0
        %v694 = vand.u32 %v206, 4294901760
        %v695 = vsub.f32 %v206, %v694
        %v696 = vand.u32 %v695, 4294901760
        %697 = vmatpush1.msra.mxu0 %v696
        %698 = vmatprep.subr.mxu0 0.0
        %v699 = vand.u32 %v207, 4294901760
        %v700 = vsub.f32 %v207, %v699
        %v701 = vand.u32 %v700, 4294901760
        %702 = vmatpush1.msra.mxu0 %v701
        %703 = vmatprep.subr.mxu0 0.0
        %v704 = vand.u32 %v208, 4294901760
        %v705 = vsub.f32 %v208, %v704
        %v706 = vand.u32 %v705, 4294901760
        %707 = vmatpush1.msra.mxu0 %v706
        %708 = vmatprep.subr.mxu0 0.0
        %v709 = vand.u32 %v209, 4294901760
        %v710 = vsub.f32 %v209, %v709
        %v711 = vand.u32 %v710, 4294901760
        %712 = vmatpush1.msra.mxu0 %v711
        %713 = vmatprep.subr.mxu0 0.0
        %v714 = vand.u32 %v210, 4294901760
        %v715 = vsub.f32 %v210, %v714
        %v716 = vand.u32 %v715, 4294901760
        %717 = vmatpush1.msra.mxu0 %v716
        %718 = vmatprep.subr.mxu0 0.0
        %v719 = vand.u32 %v211, 4294901760
        %v720 = vsub.f32 %v211, %v719
        %v721 = vand.u32 %v720, 4294901760
        %722 = vmatpush1.msra.mxu0 %v721
        %723 = vmatprep.subr.mxu0 0.0
        %v724 = vand.u32 %v212, 4294901760
        %v725 = vsub.f32 %v212, %v724
        %v726 = vand.u32 %v725, 4294901760
        %727 = vmatpush1.msra.mxu0 %v726
        %728 = vmatprep.subr.mxu0 0.0
        %729 = vmatpush1.msra.mxu0 0.0
        %730 = vmatprep.subr.mxu0 0.0
        %731 = vmatpush1.msra.mxu0 0.0
        %732 = vmatprep.subr.mxu0 0.0
        %733 = vmatpush1.msra.mxu0 0.0
        %734 = vmatprep.subr.mxu0 0.0
        %735 = vmatpush1.msra.mxu0 0.0
        %736 = vmatprep.subr.mxu0 0.0
        %737 = vmatpush1.msra.mxu0 0.0
        %738 = vmatprep.subr.mxu0 0.0
        %739 = vmatpush1.msra.mxu0 0.0
        %740 = vmatprep.subr.mxu0 0.0
        %741 = vmatpush1.msra.mxu0 0.0
        %742 = vmatprep.subr.mxu0 0.0
        %743 = vmatpush1.msra.mxu0 0.0
        %744 = vmatprep.subr.mxu0 0.0
        %745 = vmatpush1.msra.mxu0 0.0
        %746 = vmatprep.subr.mxu0 0.0
        %747 = vmatpush1.msra.mxu0 0.0
        %748 = vmatprep.subr.mxu0 0.0
        %749 = vmatpush1.msra.mxu0 0.0
        %750 = vmatprep.subr.mxu0 0.0
        %751 = vmatpush1.msra.mxu0 0.0
        %752 = vmatprep.subr.mxu0 0.0
        %753 = vmatpush1.msra.mxu0 0.0
        %754 = vmatprep.subr.mxu0 0.0
        %755 = vmatpush1.msra.mxu0 0.0
        %756 = vmatprep.subr.mxu0 0.0
        %757 = vmatpush1.msra.mxu0 0.0
        %758 = vmatprep.subr.mxu0 0.0
        %759 = vmatpush1.msra.mxu0 0.0
        %760 = vmatprep.mubr.f32.mxu0 0.0
        %v761 = vand.u32 %v196, 4294901760
        %762 = vmatmul.mubr.f32.gmra.mrb[0].mxu0 %v761
        %v763 = vpop.f32.mrb[0].mxu0
        %v764 = vadd.f32 %v645, %v763
        %v765 = vpop.f32.mrb[0].mxu0
        %766 = vdwg.mxu0
        %767 = vmatprep.subr.mxu0 0.0
        %v768 = vand.u32 %v197, 4294901760
        %769 = vmatpush1.msra.mxu0 %v768
        %770 = vmatprep.subr.mxu0 0.0
        %v771 = vand.u32 %v198, 4294901760
        %772 = vmatpush1.msra.mxu0 %v771
        %773 = vmatprep.subr.mxu0 0.0
        %v774 = vand.u32 %v199, 4294901760
        %775 = vmatpush1.msra.mxu0 %v774
        %776 = vmatprep.subr.mxu0 0.0
        %v777 = vand.u32 %v200, 4294901760
        %778 = vmatpush1.msra.mxu0 %v777
        %779 = vmatprep.subr.mxu0 0.0
        %v780 = vand.u32 %v201, 4294901760
        %781 = vmatpush1.msra.mxu0 %v780
        %782 = vmatprep.subr.mxu0 0.0
        %v783 = vand.u32 %v202, 4294901760
        %784 = vmatpush1.msra.mxu0 %v783
        %785 = vmatprep.subr.mxu0 0.0
        %v786 = vand.u32 %v203, 4294901760
        %787 = vmatpush1.msra.mxu0 %v786
        %788 = vmatprep.subr.mxu0 0.0
        %v789 = vand.u32 %v204, 4294901760
        %790 = vmatpush1.msra.mxu0 %v789
        %791 = vmatprep.subr.mxu0 0.0
        %v792 = vand.u32 %v205, 4294901760
        %793 = vmatpush1.msra.mxu0 %v792
        %794 = vmatprep.subr.mxu0 0.0
        %v795 = vand.u32 %v206, 4294901760
        %796 = vmatpush1.msra.mxu0 %v795
        %797 = vmatprep.subr.mxu0 0.0
        %v798 = vand.u32 %v207, 4294901760
        %799 = vmatpush1.msra.mxu0 %v798
        %800 = vmatprep.subr.mxu0 0.0
        %v801 = vand.u32 %v208, 4294901760
        %802 = vmatpush1.msra.mxu0 %v801
        %803 = vmatprep.subr.mxu0 0.0
        %v804 = vand.u32 %v209, 4294901760
        %805 = vmatpush1.msra.mxu0 %v804
        %806 = vmatprep.subr.mxu0 0.0
        %v807 = vand.u32 %v210, 4294901760
        %808 = vmatpush1.msra.mxu0 %v807
        %809 = vmatprep.subr.mxu0 0.0
        %v810 = vand.u32 %v211, 4294901760
        %811 = vmatpush1.msra.mxu0 %v810
        %812 = vmatprep.subr.mxu0 0.0
        %v813 = vand.u32 %v212, 4294901760
        %814 = vmatpush1.msra.mxu0 %v813
        %815 = vmatprep.subr.mxu0 0.0
        %816 = vmatpush1.msra.mxu0 0.0
        %817 = vmatprep.subr.mxu0 0.0
        %818 = vmatpush1.msra.mxu0 0.0
        %819 = vmatprep.subr.mxu0 0.0
        %820 = vmatpush1.msra.mxu0 0.0
        %821 = vmatprep.subr.mxu0 0.0
        %822 = vmatpush1.msra.mxu0 0.0
        %823 = vmatprep.subr.mxu0 0.0
        %824 = vmatpush1.msra.mxu0 0.0
        %825 = vmatprep.subr.mxu0 0.0
        %826 = vmatpush1.msra.mxu0 0.0
        %827 = vmatprep.subr.mxu0 0.0
        %828 = vmatpush1.msra.mxu0 0.0
        %829 = vmatprep.subr.mxu0 0.0
        %830 = vmatpush1.msra.mxu0 0.0
        %831 = vmatprep.subr.mxu0 0.0
        %832 = vmatpush1.msra.mxu0 0.0
        %833 = vmatprep.subr.mxu0 0.0
        %834 = vmatpush1.msra.mxu0 0.0
        %835 = vmatprep.subr.mxu0 0.0
        %836 = vmatpush1.msra.mxu0 0.0
        %837 = vmatprep.subr.mxu0 0.0
        %838 = vmatpush1.msra.mxu0 0.0
        %839 = vmatprep.subr.mxu0 0.0
        %840 = vmatpush1.msra.mxu0 0.0
        %841 = vmatprep.subr.mxu0 0.0
        %842 = vmatpush1.msra.mxu0 0.0
        %843 = vmatprep.subr.mxu0 0.0
        %844 = vmatpush1.msra.mxu0 0.0
        %845 = vmatprep.subr.mxu0 0.0
        %846 = vmatpush1.msra.mxu0 0.0
        %847 = vmatprep.mubr.f32.mxu0 0.0
        %v848 = vand.u32 %v196, 4294901760
        %849 = vmatmul.mubr.f32.gmra.mrb[0].mxu0 %v848
        %v850 = vpop.f32.mrb[0].mxu0
        %v851 = vadd.f32 %v764, %v850
        %v852 = vpop.f32.mrb[0].mxu0
        %853 = vdwg.mxu0
        %v854 = vrsqrt.pop %v851
        %v855 = vmul.f32 %v851, %v854
        %vm856 = vcmp.eq.f32.partialorder %v851, inf
        %v857 = vsel %vm856, %v851, %v855
        %vm858 = vcmp.eq.f32.partialorder %v851, 0.0
        %v859 = vand.u32 %v851, 2147483648
        %v860 = vsel %vm858, %v859, %v857
        %v861 = vld [vmem:[#allocation2] sm:$0xff]
        %v862 = vadd.f32 %v860, 0.0
        %v863 = vadd.f32 %v861, %v862
        %864 = vst [vmem:[#allocation2] sm:$0xff] %v863
        // Predicated region
        $region41: #{tpu_custom_call.1} parent=27 // pred_check
          %p865 = pneg %p190
        $region42: #{tpu_custom_call.1} parent=27 // pred_check_branch
          %867 = sbr.rel (%p865) target = $region44
        $region43: #{tpu_custom_call.1} parent=27 // pred_region
          %v868 = vld [vmem:[#allocation2] sm:$0xff]
          %869 = vst [vmem:[%s188] sm:$0xff] %v868
        $region44: #{tpu_custom_call.1} parent=27 // pred_fallthru
          _
        %s870 = sand.u32 %s89, 1
        %s871 = scalar_lea.sflag [#allocation5], %s870
        %s872 = sand.u32 %s89, 1
        %s873 = smul.addr %s872, 8
        %s874 = scalar_lea.vmem [#allocation8], %s873
        // Predicated region
        $region45: #{tpu_custom_call.1} parent=27 // pred_check
          %p875 = pneg %p99
        $region46: #{tpu_custom_call.1} parent=27 // pred_check_branch
          %877 = sbr.rel (%p875) target = $region48
        $region47: #{tpu_custom_call.1} parent=27 // pred_region
          %s879 = ssub.s32 128, 128
          %880 = vsyncadd %s871, %s879
          %s881 = smul.addr %s24, 128
          %s882 = scalar_lea.hbm %s2, %s881
          %s884 = sshll.u32 %s874, 4
          %s885 = int_to_ptr.vmem [resolvable:$true] %s884
          %887 = dma.vmem_to_hbm [thread:$0]  %s885, 128, %s882, %s871
        $region48: #{tpu_custom_call.1} parent=27 // pred_fallthru
          _
      $region28: #{tpu_custom_call.1} parent=5 // pred_fallthru
        _
      %p888 = scmp.le.s32.totalorder 2, %s15
      // Predicated region
      $region49: #{tpu_custom_call.1} parent=5 // pred_check
        %p889 = pneg %p888
      $region50: #{tpu_custom_call.1} parent=5 // pred_check_branch
        %891 = sbr.rel (%p889) target = $region52
      $region51: #{tpu_custom_call.1} parent=5 // pred_region
        %s892 = ssub.s32 %s15, 2
        // Predicated region
        $region53: #{tpu_custom_call.1} parent=51 // pred_check
          %p893 = pneg %p105
        $region54: #{tpu_custom_call.1} parent=51 // pred_check_branch
          %895 = sbr.rel (%p893) target = $region56
        $region55: #{tpu_custom_call.1} parent=51 // pred_region
          %s896 = sand.u32 %s90, 1
          %s897 = scalar_lea.sflag [#allocation5], %s896
          %s898 = sand.u32 %s90, 1
          %s899 = smul.addr %s898, 8
          %s900 = scalar_lea.vmem [#allocation8], %s899
          %901 = dma.done %s897, 128
        $region56: #{tpu_custom_call.1} parent=51 // pred_fallthru
          _
      $region52: #{tpu_custom_call.1} parent=5 // pred_fallthru
        _
    $region6: #{tpu_custom_call.1} parent=1 // loop_footer
      %s19 = sadd.s32 1, %s15
    $region7: #{tpu_custom_call.1} parent=1 // loop_footer_branch
      %14 = sbr.rel target = $region3
    $region8: #{tpu_custom_call.1} parent=1 // loop_exit
      _
    %902 = vsyncpa [#allocation4], 1
    %s903 = scalar_lea.sflag [#allocation4], 1
    %904 = vsyncpa %s903, 1
    %905 = vsyncpa [#allocation7], 1
    %906 = vsyncpa [#allocation5], 1
    %s907 = scalar_lea.sflag [#allocation5], 1
    %908 = vsyncpa %s907, 1

</llo_original>
